<compile_context>
chip_gen: v5e
topology: v5e:2x2
jax: 0.10.0
libtpu: 0.0.40
codegen_flags: <defaults>
</compile_context>

<pallas_src>
import functools

import jax
import jax.numpy as jnp
from jax.experimental import pallas as pl
from jax.experimental.pallas import tpu as pltpu

# Module-fixed dims
C_IN = 128
C_OUT = 64
KH = KW = 3


def _conv_kernel(x_ref, w_ref, b_ref, o_ref, *, W, M):
    # x_ref: (1, (H+1)*W, C_IN)    bf16, flattened NHWC image + 1 zero pad row
    # w_ref: (KH*KW, C_IN, C_OUT)  bf16
    # b_ref: (1, C_OUT)            f32
    # o_ref: (1, M, C_OUT)         f32, M = H_out * W (garbage cols cropped outside)
    acc = jnp.zeros((M, C_OUT), dtype=jnp.float32)
    for kh in range(KH):            # statically unrolled 3x3 taps
        for kw in range(KW):
            start = kh * W + kw     # static; contiguous row window of length M
            patch = x_ref[0, pl.ds(start, M), :]              # (M, C_IN)
            acc += jnp.dot(patch, w_ref[kh * KW + kw],
                           preferred_element_type=jnp.float32)
    acc += b_ref[...]               # (1, C_OUT) broadcasts over all rows
    o_ref[0] = acc.astype(o_ref.dtype)


@jax.jit
def cnn_encoder_forward(x_nchw, weight_oihw, bias):
    """Forward pass of CNNEncoder.

    x_nchw:      (B, 128, H, W)  float32 (PyTorch NCHW convention)
    weight_oihw: (64, 128, 3, 3) float32 (PyTorch Conv2d weight layout)
    bias:        (64,)           float32
    returns:     (B, 64, H-2, W-2) float32 (NCHW, matching PyTorch output)
    """
    B, C, H, W = x_nchw.shape
    assert C == C_IN
    H_out, W_out = H - KH + 1, W - KW + 1
    M = H_out * W   # full-width output rows (extra W - W_out cols cropped below)

    # Layout glue (fused into a single HBM pass by XLA under jit):
    # NCHW -> flattened NHWC rows, bf16, plus one zero pad row so every tap's
    # contiguous row window stays in-bounds.
    x = jnp.transpose(x_nchw, (0, 2, 3, 1)).astype(jnp.bfloat16)      # (B,H,W,C)
    x = x.reshape(B, H * W, C_IN)
    x = jnp.pad(x, ((0, 0), (0, W), (0, 0)))                          # (B,(H+1)*W,C)

    # OIHW -> (tap, C_IN, C_OUT), bf16
    w = jnp.transpose(weight_oihw, (2, 3, 1, 0))                      # (KH,KW,Ci,Co)
    w = w.reshape(KH * KW, C_IN, C_OUT).astype(jnp.bfloat16)
    b2d = bias.reshape(1, C_OUT).astype(jnp.float32)

    kernel = functools.partial(_conv_kernel, W=W, M=M)

    flops = 2 * B * H_out * W_out * KH * KW * C_IN * C_OUT
    bytes_accessed = (x.size * 2 + w.size * 2 + b2d.size * 4
                      + B * M * C_OUT * 4)

    out_flat = pl.pallas_call(
        kernel,
        out_shape=jax.ShapeDtypeStruct((B, M, C_OUT), jnp.float32),
        grid_spec=pltpu.PrefetchScalarGridSpec(
            num_scalar_prefetch=0,
            grid=(B,),
            in_specs=[
                pl.BlockSpec((1, (H + 1) * W, C_IN), lambda b: (b, 0, 0)),
                pl.BlockSpec((KH * KW, C_IN, C_OUT), lambda b: (0, 0, 0)),
                pl.BlockSpec((1, C_OUT), lambda b: (0, 0)),
            ],
            out_specs=pl.BlockSpec((1, M, C_OUT), lambda b: (b, 0, 0)),
        ),
        compiler_params=pltpu.CompilerParams(
            dimension_semantics=("parallel",)),
        cost_estimate=pl.CostEstimate(
            flops=flops, transcendentals=0, bytes_accessed=bytes_accessed),
    )(x, w, b2d)

    # Crop the W - W_out garbage columns and return NCHW (crop + transpose fuse
    # into a single XLA pass under jit).
    out = out_flat.reshape(B, H_out, W, C_OUT)[:, :, :W_out, :]
    return jnp.transpose(out, (0, 3, 1, 2))


if __name__ == "__main__":
    key = jax.random.PRNGKey(0)
    k_x, k_w, k_b = jax.random.split(key, 3)

    # Small shapes consistent with the module: in-channels fixed at 128.
    B, H, W = 2, 10, 10
    x = jax.random.normal(k_x, (B, C_IN, H, W), dtype=jnp.float32)

    # Deterministic parameter init (PyTorch Conv2d default-ish uniform range).
    fan_in = C_IN * KH * KW
    bound = 1.0 / (fan_in ** 0.5)
    weight = jax.random.uniform(k_w, (C_OUT, C_IN, KH, KW),
                                minval=-bound, maxval=bound, dtype=jnp.float32)
    bias = jax.random.uniform(k_b, (C_OUT,),
                              minval=-bound, maxval=bound, dtype=jnp.float32)

    out = jax.block_until_ready(cnn_encoder_forward(x, weight, bias))
    assert out.shape == (B, C_OUT, H - 2, W - 2), out.shape

    # Reference: XLA conv on the same bf16-rounded operands (the kernel computes
    # with bf16 operands and f32 accumulation).
    ref = jax.lax.conv_general_dilated(
        x.astype(jnp.bfloat16).astype(jnp.float32),
        weight.astype(jnp.bfloat16).astype(jnp.float32),
        window_strides=(1, 1), padding="VALID",
        dimension_numbers=("NCHW", "OIHW", "NCHW"),
    ) + bias.reshape(1, C_OUT, 1, 1)
    err = float(jnp.max(jnp.abs(out - ref)))
    assert jnp.allclose(out, ref, atol=2e-2, rtol=2e-2), err

    print("KERNEL_OK")
</pallas_src>

<mosaic_0001>
module attributes {stable_mosaic.version = 11 : i64} {
  func.func @_conv_kernel(%arg0: i32, %arg1: memref<1x110x128xbf16, #tpu.memory_space<vmem>>, %arg2: memref<9x128x64xbf16, #tpu.memory_space<vmem>>, %arg3: memref<1x64xf32, #tpu.memory_space<vmem>>, %arg4: memref<1x80x64xf32, #tpu.memory_space<vmem>>) attributes {dimension_semantics = [#tpu.dimension_semantics<parallel>], iteration_bounds = array<i64: 2>, scalar_prefetch = 0 : i64, scratch_operands = 0 : i64, tpu.core_type = #tpu.core_type<tc>, window_params = [{transform_indices = @transform_0, window_bounds = array<i64: 1, 110, 128>}, {pipeline_mode = #tpu.pipeline_mode<synchronous>, transform_indices = @transform_1, window_bounds = array<i64: 9, 128, 64>}, {pipeline_mode = #tpu.pipeline_mode<synchronous>, transform_indices = @transform_2, window_bounds = array<i64: 1, 64>}, {transform_indices = @transform_3, window_bounds = array<i64: 1, 80, 64>}]} {
    %cst = arith.constant 0.000000e+00 : f32
    %0 = vector.broadcast %cst : f32 to vector<80x64xf32>
    %c0 = arith.constant 0 : index
    %c0_0 = arith.constant 0 : index
    %c0_1 = arith.constant 0 : index
    %1 = vector.load %arg1[%c0, %c0_0, %c0_1] : memref<1x110x128xbf16, #tpu.memory_space<vmem>>, vector<1x80x128xbf16>
    %2 = vector.shape_cast %1 : vector<1x80x128xbf16> to vector<80x128xbf16>
    %c0_2 = arith.constant 0 : index
    %c0_3 = arith.constant 0 : index
    %c0_4 = arith.constant 0 : index
    %3 = vector.load %arg2[%c0_2, %c0_3, %c0_4] : memref<9x128x64xbf16, #tpu.memory_space<vmem>>, vector<1x128x64xbf16>
    %4 = vector.shape_cast %3 : vector<1x128x64xbf16> to vector<128x64xbf16>
    %cst_5 = arith.constant dense<0.000000e+00> : vector<80x64xf32>
    %5 = tpu.matmul %2, %4, %cst_5 {dimension_numbers = #tpu.dot_dimension_numbers<[1], [0], [0], [1], [0, 0, 1, 1], [], []>} : vector<80x128xbf16>, vector<128x64xbf16>, vector<80x64xf32> -> vector<80x64xf32>
    %6 = arith.addf %0, %5 : vector<80x64xf32>
    %c0_6 = arith.constant 0 : index
    %c1 = arith.constant 1 : index
    %c0_7 = arith.constant 0 : index
    %7 = vector.load %arg1[%c0_6, %c1, %c0_7] : memref<1x110x128xbf16, #tpu.memory_space<vmem>>, vector<1x80x128xbf16>
    %8 = vector.shape_cast %7 : vector<1x80x128xbf16> to vector<80x128xbf16>
    %c1_8 = arith.constant 1 : index
    %c0_9 = arith.constant 0 : index
    %c0_10 = arith.constant 0 : index
    %9 = vector.load %arg2[%c1_8, %c0_9, %c0_10] : memref<9x128x64xbf16, #tpu.memory_space<vmem>>, vector<1x128x64xbf16>
    %10 = vector.shape_cast %9 : vector<1x128x64xbf16> to vector<128x64xbf16>
    %cst_11 = arith.constant dense<0.000000e+00> : vector<80x64xf32>
    %11 = tpu.matmul %8, %10, %cst_11 {dimension_numbers = #tpu.dot_dimension_numbers<[1], [0], [0], [1], [0, 0, 1, 1], [], []>} : vector<80x128xbf16>, vector<128x64xbf16>, vector<80x64xf32> -> vector<80x64xf32>
    %12 = arith.addf %6, %11 : vector<80x64xf32>
    %c0_12 = arith.constant 0 : index
    %c2 = arith.constant 2 : index
    %c0_13 = arith.constant 0 : index
    %13 = vector.load %arg1[%c0_12, %c2, %c0_13] : memref<1x110x128xbf16, #tpu.memory_space<vmem>>, vector<1x80x128xbf16>
    %14 = vector.shape_cast %13 : vector<1x80x128xbf16> to vector<80x128xbf16>
    %c2_14 = arith.constant 2 : index
    %c0_15 = arith.constant 0 : index
    %c0_16 = arith.constant 0 : index
    %15 = vector.load %arg2[%c2_14, %c0_15, %c0_16] : memref<9x128x64xbf16, #tpu.memory_space<vmem>>, vector<1x128x64xbf16>
    %16 = vector.shape_cast %15 : vector<1x128x64xbf16> to vector<128x64xbf16>
    %cst_17 = arith.constant dense<0.000000e+00> : vector<80x64xf32>
    %17 = tpu.matmul %14, %16, %cst_17 {dimension_numbers = #tpu.dot_dimension_numbers<[1], [0], [0], [1], [0, 0, 1, 1], [], []>} : vector<80x128xbf16>, vector<128x64xbf16>, vector<80x64xf32> -> vector<80x64xf32>
    %18 = arith.addf %12, %17 : vector<80x64xf32>
    %c0_18 = arith.constant 0 : index
    %c10 = arith.constant 10 : index
    %c0_19 = arith.constant 0 : index
    %19 = vector.load %arg1[%c0_18, %c10, %c0_19] : memref<1x110x128xbf16, #tpu.memory_space<vmem>>, vector<1x80x128xbf16>
    %20 = vector.shape_cast %19 : vector<1x80x128xbf16> to vector<80x128xbf16>
    %c3 = arith.constant 3 : index
    %c0_20 = arith.constant 0 : index
    %c0_21 = arith.constant 0 : index
    %21 = vector.load %arg2[%c3, %c0_20, %c0_21] : memref<9x128x64xbf16, #tpu.memory_space<vmem>>, vector<1x128x64xbf16>
    %22 = vector.shape_cast %21 : vector<1x128x64xbf16> to vector<128x64xbf16>
    %cst_22 = arith.constant dense<0.000000e+00> : vector<80x64xf32>
    %23 = tpu.matmul %20, %22, %cst_22 {dimension_numbers = #tpu.dot_dimension_numbers<[1], [0], [0], [1], [0, 0, 1, 1], [], []>} : vector<80x128xbf16>, vector<128x64xbf16>, vector<80x64xf32> -> vector<80x64xf32>
    %24 = arith.addf %18, %23 : vector<80x64xf32>
    %c0_23 = arith.constant 0 : index
    %c11 = arith.constant 11 : index
    %c0_24 = arith.constant 0 : index
    %25 = vector.load %arg1[%c0_23, %c11, %c0_24] : memref<1x110x128xbf16, #tpu.memory_space<vmem>>, vector<1x80x128xbf16>
    %26 = vector.shape_cast %25 : vector<1x80x128xbf16> to vector<80x128xbf16>
    %c4 = arith.constant 4 : index
    %c0_25 = arith.constant 0 : index
    %c0_26 = arith.constant 0 : index
    %27 = vector.load %arg2[%c4, %c0_25, %c0_26] : memref<9x128x64xbf16, #tpu.memory_space<vmem>>, vector<1x128x64xbf16>
    %28 = vector.shape_cast %27 : vector<1x128x64xbf16> to vector<128x64xbf16>
    %cst_27 = arith.constant dense<0.000000e+00> : vector<80x64xf32>
    %29 = tpu.matmul %26, %28, %cst_27 {dimension_numbers = #tpu.dot_dimension_numbers<[1], [0], [0], [1], [0, 0, 1, 1], [], []>} : vector<80x128xbf16>, vector<128x64xbf16>, vector<80x64xf32> -> vector<80x64xf32>
    %30 = arith.addf %24, %29 : vector<80x64xf32>
    %c0_28 = arith.constant 0 : index
    %c12 = arith.constant 12 : index
    %c0_29 = arith.constant 0 : index
    %31 = vector.load %arg1[%c0_28, %c12, %c0_29] : memref<1x110x128xbf16, #tpu.memory_space<vmem>>, vector<1x80x128xbf16>
    %32 = vector.shape_cast %31 : vector<1x80x128xbf16> to vector<80x128xbf16>
    %c5 = arith.constant 5 : index
    %c0_30 = arith.constant 0 : index
    %c0_31 = arith.constant 0 : index
    %33 = vector.load %arg2[%c5, %c0_30, %c0_31] : memref<9x128x64xbf16, #tpu.memory_space<vmem>>, vector<1x128x64xbf16>
    %34 = vector.shape_cast %33 : vector<1x128x64xbf16> to vector<128x64xbf16>
    %cst_32 = arith.constant dense<0.000000e+00> : vector<80x64xf32>
    %35 = tpu.matmul %32, %34, %cst_32 {dimension_numbers = #tpu.dot_dimension_numbers<[1], [0], [0], [1], [0, 0, 1, 1], [], []>} : vector<80x128xbf16>, vector<128x64xbf16>, vector<80x64xf32> -> vector<80x64xf32>
    %36 = arith.addf %30, %35 : vector<80x64xf32>
    %c0_33 = arith.constant 0 : index
    %c20 = arith.constant 20 : index
    %c0_34 = arith.constant 0 : index
    %37 = vector.load %arg1[%c0_33, %c20, %c0_34] : memref<1x110x128xbf16, #tpu.memory_space<vmem>>, vector<1x80x128xbf16>
    %38 = vector.shape_cast %37 : vector<1x80x128xbf16> to vector<80x128xbf16>
    %c6 = arith.constant 6 : index
    %c0_35 = arith.constant 0 : index
    %c0_36 = arith.constant 0 : index
    %39 = vector.load %arg2[%c6, %c0_35, %c0_36] : memref<9x128x64xbf16, #tpu.memory_space<vmem>>, vector<1x128x64xbf16>
    %40 = vector.shape_cast %39 : vector<1x128x64xbf16> to vector<128x64xbf16>
    %cst_37 = arith.constant dense<0.000000e+00> : vector<80x64xf32>
    %41 = tpu.matmul %38, %40, %cst_37 {dimension_numbers = #tpu.dot_dimension_numbers<[1], [0], [0], [1], [0, 0, 1, 1], [], []>} : vector<80x128xbf16>, vector<128x64xbf16>, vector<80x64xf32> -> vector<80x64xf32>
    %42 = arith.addf %36, %41 : vector<80x64xf32>
    %c0_38 = arith.constant 0 : index
    %c21 = arith.constant 21 : index
    %c0_39 = arith.constant 0 : index
    %43 = vector.load %arg1[%c0_38, %c21, %c0_39] : memref<1x110x128xbf16, #tpu.memory_space<vmem>>, vector<1x80x128xbf16>
    %44 = vector.shape_cast %43 : vector<1x80x128xbf16> to vector<80x128xbf16>
    %c7 = arith.constant 7 : index
    %c0_40 = arith.constant 0 : index
    %c0_41 = arith.constant 0 : index
    %45 = vector.load %arg2[%c7, %c0_40, %c0_41] : memref<9x128x64xbf16, #tpu.memory_space<vmem>>, vector<1x128x64xbf16>
    %46 = vector.shape_cast %45 : vector<1x128x64xbf16> to vector<128x64xbf16>
    %cst_42 = arith.constant dense<0.000000e+00> : vector<80x64xf32>
    %47 = tpu.matmul %44, %46, %cst_42 {dimension_numbers = #tpu.dot_dimension_numbers<[1], [0], [0], [1], [0, 0, 1, 1], [], []>} : vector<80x128xbf16>, vector<128x64xbf16>, vector<80x64xf32> -> vector<80x64xf32>
    %48 = arith.addf %42, %47 : vector<80x64xf32>
    %c0_43 = arith.constant 0 : index
    %c22 = arith.constant 22 : index
    %c0_44 = arith.constant 0 : index
    %49 = vector.load %arg1[%c0_43, %c22, %c0_44] : memref<1x110x128xbf16, #tpu.memory_space<vmem>>, vector<1x80x128xbf16>
    %50 = vector.shape_cast %49 : vector<1x80x128xbf16> to vector<80x128xbf16>
    %c8 = arith.constant 8 : index
    %c0_45 = arith.constant 0 : index
    %c0_46 = arith.constant 0 : index
    %51 = vector.load %arg2[%c8, %c0_45, %c0_46] : memref<9x128x64xbf16, #tpu.memory_space<vmem>>, vector<1x128x64xbf16>
    %52 = vector.shape_cast %51 : vector<1x128x64xbf16> to vector<128x64xbf16>
    %cst_47 = arith.constant dense<0.000000e+00> : vector<80x64xf32>
    %53 = tpu.matmul %50, %52, %cst_47 {dimension_numbers = #tpu.dot_dimension_numbers<[1], [0], [0], [1], [0, 0, 1, 1], [], []>} : vector<80x128xbf16>, vector<128x64xbf16>, vector<80x64xf32> -> vector<80x64xf32>
    %54 = arith.addf %48, %53 : vector<80x64xf32>
    %c0_48 = arith.constant 0 : index
    %c0_49 = arith.constant 0 : index
    %55 = vector.load %arg3[%c0_48, %c0_49] : memref<1x64xf32, #tpu.memory_space<vmem>>, vector<1x64xf32>
    %56 = vector.broadcast %55 : vector<1x64xf32> to vector<80x64xf32>
    %57 = arith.addf %54, %56 : vector<80x64xf32>
    %c0_50 = arith.constant 0 : index
    %c0_51 = arith.constant 0 : index
    %c0_52 = arith.constant 0 : index
    %58 = vector.load %arg4[%c0_50, %c0_51, %c0_52] : memref<1x80x64xf32, #tpu.memory_space<vmem>>, vector<1x80x64xf32>
    %59 = vector.shape_cast %58 : vector<1x80x64xf32> to vector<80x64xf32>
    %60 = vector.shape_cast %57 : vector<80x64xf32> to vector<1x80x64xf32>
    tpu.vector_store %arg4[%c0_50, %c0_51, %c0_52], %60 {strides = array<i32>} : memref<1x80x64xf32, #tpu.memory_space<vmem>>, vector<1x80x64xf32>,
    return
  }
  func.func @transform_0(%arg0: i32) -> (i32, i32, i32) {
    %c0_i32 = arith.constant 0 : i32
    %c0_i32_0 = arith.constant 0 : i32
    %c0_i32_1 = arith.constant 0 : i32
    return %arg0, %c0_i32, %c0_i32_0 : i32, i32, i32
  }
  func.func @transform_1(%arg0: i32) -> (i32, i32, i32) {
    %c0_i32 = arith.constant 0 : i32
    %c0_i32_0 = arith.constant 0 : i32
    %c0_i32_1 = arith.constant 0 : i32
    %c0_i32_2 = arith.constant 0 : i32
    return %c0_i32, %c0_i32_0, %c0_i32_1 : i32, i32, i32
  }
  func.func @transform_2(%arg0: i32) -> (i32, i32) {
    %c0_i32 = arith.constant 0 : i32
    %c0_i32_0 = arith.constant 0 : i32
    %c0_i32_1 = arith.constant 0 : i32
    return %c0_i32, %c0_i32_0 : i32, i32
  }
  func.func @transform_3(%arg0: i32) -> (i32, i32, i32) {
    %c0_i32 = arith.constant 0 : i32
    %c0_i32_0 = arith.constant 0 : i32
    %c0_i32_1 = arith.constant 0 : i32
    return %arg0, %c0_i32, %c0_i32_0 : i32, i32, i32
  }
}

</mosaic_0001>

<llo_original>
// kernel: cnn_encoder_forward.1
$region0: #{cnn_encoder_forward.1}
  #allocation0 [shape = 'u32[]', space=smem, size = 0x4, offset = 0x4, fixed_abs, tag = 'smem constant byte address 0x4 - core index']
  #allocation1 [shape = 'u32[72,128]{1,0:T(1,128)}', space=vmem, size = 0x9000, scoped, tag = 'internal scratch']
  %s0 = inlined_call_operand.vmem [shape: bf16[2,110,128], index: 0, kind: input, shape index: {}]
  %s1 = inlined_call_operand.vmem [shape: bf16[9,128,64], index: 1, kind: input, shape index: {}]
  %s2 = inlined_call_operand.vmem [shape: f32[1,64], index: 2, kind: input, shape index: {}]
  %s3 = inlined_call_operand.vmem [shape: f32[2,80,64], index: 3, kind: output, shape index: {}]
  %s4 = sld [smem:[#allocation0]]
  $region45: #{cnn_encoder_forward.1} parent=0
    _
  %s6 = ssub.s32 1, %s4
  %s7 = scalar_select 0, %s6, %s4
  loop: start=0, step=1, limit=4
  $region2: #{cnn_encoder_forward.1} parent=0 // loop_pre_header
    _
  $region3: #{cnn_encoder_forward.1} parent=0 // loop_header
    %s9 = sphi 0, %s13
    %p10 = scmp.ge.s32.totalorder %s9, 4
    %s19 = sphi 0, %s21
    %s22 = sphi 0, %s19
    %s23 = sphi 0, %s22
    %s39 = sphi 0, %s23
    %s43 = sphi 0, %s43
    %s45 = sphi 0, %s43
    %s46 = sphi 0, %s45
    %s60 = sphi 0, %s46
    %s64 = sphi 0, %s64
    %s66 = sphi 0, %s64
    %s67 = sphi 0, %s66
    %s81 = sphi 0, %s67
    %s87 = sphi 0, %s89
    %s90 = sphi 0, %s87
    %s91 = sphi 0, %s90
    %s107 = sphi 0, %s91
  $region4: #{cnn_encoder_forward.1} parent=0 // loop_header_branch
    %12 = sbr.rel (%p10) target = $region8
  $region5: #{cnn_encoder_forward.1} parent=0 // loop_body
    %s14 = ssub.s32 %s9, 1
    %s15 = ssub.s32 %s9, 2
    %s16 = sadd.s32 %s9, 1
    %s17 = ssub.s32 %s9, %s16
    %p18 = scmp.eq.s32.totalorder %s17, 0
    %s20 = sadd.s32 %s19, 1
    %s21 = scalar_select %p18, %s19, %s20
    %p24 = pneg %p18
    %p25 = scmp.eq.s32.totalorder %s9, 1
    %p26 = por %p24, %p25
    %p27 = scmp.ne.s32.totalorder %s19, %s22
    %p28 = scmp.eq.s32.totalorder %s9, 0
    %p29 = por %p27, %p28
    %p30 = scmp.ne.s32.totalorder %s19, %s22
    %p31 = scmp.eq.s32.totalorder %s14, 1
    %p32 = por %p30, %p31
    %p33 = scmp.ne.s32.totalorder %s22, %s23
    %p34 = scmp.eq.s32.totalorder %s14, 0
    %p35 = por %p33, %p34
    %p36 = scmp.ne.s32.totalorder %s22, %s23
    %p37 = scmp.eq.s32.totalorder %s15, 1
    %p38 = por %p36, %p37
    %p40 = scmp.ne.s32.totalorder %s23, %s39
    %p41 = scmp.eq.s32.totalorder %s15, 0
    %p42 = por %p40, %p41
    %s44 = sadd.s32 %s43, 1
    %p47 = scmp.eq.s32.totalorder %s9, 1
    %p48 = scmp.ne.s32.totalorder %s43, %s45
    %p49 = scmp.eq.s32.totalorder %s9, 0
    %p50 = por %p48, %p49
    %p51 = scmp.ne.s32.totalorder %s43, %s45
    %p52 = scmp.eq.s32.totalorder %s14, 1
    %p53 = por %p51, %p52
    %p54 = scmp.ne.s32.totalorder %s45, %s46
    %p55 = scmp.eq.s32.totalorder %s14, 0
    %p56 = por %p54, %p55
    %p57 = scmp.ne.s32.totalorder %s45, %s46
    %p58 = scmp.eq.s32.totalorder %s15, 1
    %p59 = por %p57, %p58
    %p61 = scmp.ne.s32.totalorder %s46, %s60
    %p62 = scmp.eq.s32.totalorder %s15, 0
    %p63 = por %p61, %p62
    %s65 = sadd.s32 %s64, 1
    %p68 = scmp.eq.s32.totalorder %s9, 1
    %p69 = scmp.ne.s32.totalorder %s64, %s66
    %p70 = scmp.eq.s32.totalorder %s9, 0
    %p71 = por %p69, %p70
    %p72 = scmp.ne.s32.totalorder %s64, %s66
    %p73 = scmp.eq.s32.totalorder %s14, 1
    %p74 = por %p72, %p73
    %p75 = scmp.ne.s32.totalorder %s66, %s67
    %p76 = scmp.eq.s32.totalorder %s14, 0
    %p77 = por %p75, %p76
    %p78 = scmp.ne.s32.totalorder %s66, %s67
    %p79 = scmp.eq.s32.totalorder %s15, 1
    %p80 = por %p78, %p79
    %p82 = scmp.ne.s32.totalorder %s67, %s81
    %p83 = scmp.eq.s32.totalorder %s15, 0
    %p84 = por %p82, %p83
    %s85 = ssub.s32 %s9, %s16
    %p86 = scmp.eq.s32.totalorder %s85, 0
    %s88 = sadd.s32 %s87, 1
    %s89 = scalar_select %p86, %s87, %s88
    %p92 = pneg %p86
    %p93 = scmp.eq.s32.totalorder %s9, 1
    %p94 = por %p92, %p93
    %p95 = scmp.ne.s32.totalorder %s87, %s90
    %p96 = scmp.eq.s32.totalorder %s9, 0
    %p97 = por %p95, %p96
    %p98 = scmp.ne.s32.totalorder %s87, %s90
    %p99 = scmp.eq.s32.totalorder %s14, 1
    %p100 = por %p98, %p99
    %p101 = scmp.ne.s32.totalorder %s90, %s91
    %p102 = scmp.eq.s32.totalorder %s14, 0
    %p103 = por %p101, %p102
    %p104 = scmp.ne.s32.totalorder %s90, %s91
    %p105 = scmp.eq.s32.totalorder %s15, 1
    %p106 = por %p104, %p105
    %p108 = scmp.ne.s32.totalorder %s91, %s107
    %p109 = scmp.eq.s32.totalorder %s15, 0
    %p110 = por %p108, %p109
    %p111 = scmp.le.s32.totalorder 1, %s9
    %p112 = scmp.lt.s32.totalorder %s9, 3
    %p113 = pnand %p111, %p112
    %p114 = pneg %p113
    // Predicated region
    $region9: #{cnn_encoder_forward.1} parent=5 // pred_check
      _
    $region10: #{cnn_encoder_forward.1} parent=5 // pred_check_branch
      %116 = sbr.rel (%p113) target = $region12
    $region11: #{cnn_encoder_forward.1} parent=5 // pred_region
      %s117 = ssub.s32 %s9, 1
      // Predicated region
      $region13: #{cnn_encoder_forward.1} parent=11 // pred_check
        %p118 = pneg %p56
      $region14: #{cnn_encoder_forward.1} parent=11 // pred_check_branch
        %120 = sbr.rel (%p118) target = $region16
      $region15: #{cnn_encoder_forward.1} parent=11 // pred_region
        _
      $region16: #{cnn_encoder_forward.1} parent=11 // pred_fallthru
        _
      // Predicated region
      $region17: #{cnn_encoder_forward.1} parent=11 // pred_check
        %p121 = pneg %p77
      $region18: #{cnn_encoder_forward.1} parent=11 // pred_check_branch
        %123 = sbr.rel (%p121) target = $region20
      $region19: #{cnn_encoder_forward.1} parent=11 // pred_region
        _
      $region20: #{cnn_encoder_forward.1} parent=11 // pred_fallthru
        _
    $region12: #{cnn_encoder_forward.1} parent=5 // pred_fallthru
      _
    %p124 = scmp.lt.s32.totalorder %s9, 2
    // Predicated region
    $region21: #{cnn_encoder_forward.1} parent=5 // pred_check
      %p125 = pneg %p124
    $region22: #{cnn_encoder_forward.1} parent=5 // pred_check_branch
      %127 = sbr.rel (%p125) target = $region24
    $region23: #{cnn_encoder_forward.1} parent=5 // pred_region
      // Predicated region
      $region25: #{cnn_encoder_forward.1} parent=23 // pred_check
        %p128 = pneg %p29
      $region26: #{cnn_encoder_forward.1} parent=23 // pred_check_branch
        %130 = sbr.rel (%p128) target = $region28
      $region27: #{cnn_encoder_forward.1} parent=23 // pred_region
        %p131 = scmp.lt.s32.totalorder %s9, 1
        %s132 = scalar_select %p131, %s9, 1
        %s133 = smul.addr %s132, 14
        %s134 = smul.addr %s133, 4
        %s135 = scalar_lea.vmem %s0, %s134
      $region28: #{cnn_encoder_forward.1} parent=23 // pred_fallthru
        _
    $region24: #{cnn_encoder_forward.1} parent=5 // pred_fallthru
      _
    %p136 = scmp.le.s32.totalorder 1, %s9
    %p137 = scmp.lt.s32.totalorder %s9, 3
    %p138 = pnand %p136, %p137
    %p139 = pneg %p138
    // Predicated region
    $region29: #{cnn_encoder_forward.1} parent=5 // pred_check
      _
    $region30: #{cnn_encoder_forward.1} parent=5 // pred_check_branch
      %141 = sbr.rel (%p138) target = $region32
    $region31: #{cnn_encoder_forward.1} parent=5 // pred_region
      %s142 = ssub.s32 %s9, 1
      %p143 = scmp.lt.s32.totalorder %s14, 1
      %s144 = scalar_select %p143, %s14, 1
      %s145 = smul.addr %s144, 14
      %s146 = smul.addr %s145, 4
      %s147 = scalar_lea.vmem %s0, %s146
      %p148 = pneg %p35
      %p149 = pneg %p32
      %p150 = pneg %p56
      %p151 = pneg %p53
      %p152 = pneg %p77
      %p153 = pneg %p74
      %p154 = pneg %p103
      %p155 = pneg %p100
      %p156 = scmp.lt.s32.totalorder %s14, 1
      %s157 = scalar_select %p156, %s14, 1
      %s158 = smul.addr %s157, 10
      %s159 = smul.addr %s158, 8
      %s160 = scalar_lea.vmem %s3, %s159
      %p161 = scmp.lt.s32.totalorder %s14, 1
      %s162 = scalar_select %p161, %s14, 1
      %s163 = smul.addr %s162, 14
      %s164 = smul.addr %s163, 4
      %s165 = scalar_lea.vmem %s0, %s164
      %p166 = scmp.lt.s32.totalorder %s14, 1
      %s167 = scalar_select %p166, %s14, 1
      %s168 = smul.addr %s167, 10
      %s169 = smul.addr %s168, 8
      %s170 = scalar_lea.vmem %s3, %s169
      %v171 = vld [vmem:[%s165] sm:$0xf]
      %v172 = vld [vmem:[%s165 + $0x4] sm:$0xf]
      %v173 = vld [vmem:[%s165 + $0x8] sm:$0xf]
      %v174 = vld [vmem:[%s165 + $0xc] sm:$0xf]
      %v175 = vld [vmem:[%s165 + $0x10] sm:$0xf]
      %v176 = vld [vmem:[%s165 + $0x14] sm:$0xf]
      %v177 = vld [vmem:[%s165 + $0x18] sm:$0xf]
      %v178 = vld [vmem:[%s165 + $0x1c] sm:$0xf]
      %v179 = vld [vmem:[%s165 + $0x20] sm:$0xf]
      %v180 = vld [vmem:[%s165 + $0x24] sm:$0xf]
      %v181 = vld [vmem:[%s1] sm:$0xf]
      %v182 = vld [vmem:[%s1 + $0x4] sm:$0xf]
      %v183 = vld [vmem:[%s1 + $0x8] sm:$0xf]
      %v184 = vld [vmem:[%s1 + $0xc] sm:$0xf]
      %v185 = vld [vmem:[%s1 + $0x10] sm:$0xf]
      %v186 = vld [vmem:[%s1 + $0x14] sm:$0xf]
      %v187 = vld [vmem:[%s1 + $0x18] sm:$0xf]
      %v188 = vld [vmem:[%s1 + $0x1c] sm:$0xf]
      %v189 = vld [vmem:[%s1 + $0x20] sm:$0xf]
      %v190 = vld [vmem:[%s1 + $0x24] sm:$0xf]
      %v191 = vld [vmem:[%s1 + $0x28] sm:$0xf]
      %v192 = vld [vmem:[%s1 + $0x2c] sm:$0xf]
      %v193 = vld [vmem:[%s1 + $0x30] sm:$0xf]
      %v194 = vld [vmem:[%s1 + $0x34] sm:$0xf]
      %v195 = vld [vmem:[%s1 + $0x38] sm:$0xf]
      %v196 = vld [vmem:[%s1 + $0x3c] sm:$0xf]
      %v197 = vld [vmem:[%s165 + $0x28] sm:$0x1]
      %s198 = scalar_lea.vmem %s1, 64
      %v199 = vld [vmem:[%s198] sm:$0xf]
      %v200 = vld [vmem:[%s198 + $0x4] sm:$0xf]
      %v201 = vld [vmem:[%s198 + $0x8] sm:$0xf]
      %v202 = vld [vmem:[%s198 + $0xc] sm:$0xf]
      %v203 = vld [vmem:[%s198 + $0x10] sm:$0xf]
      %v204 = vld [vmem:[%s198 + $0x14] sm:$0xf]
      %v205 = vld [vmem:[%s198 + $0x18] sm:$0xf]
      %v206 = vld [vmem:[%s198 + $0x1c] sm:$0xf]
      %v207 = vld [vmem:[%s198 + $0x20] sm:$0xf]
      %v208 = vld [vmem:[%s198 + $0x24] sm:$0xf]
      %v209 = vld [vmem:[%s198 + $0x28] sm:$0xf]
      %v210 = vld [vmem:[%s198 + $0x2c] sm:$0xf]
      %v211 = vld [vmem:[%s198 + $0x30] sm:$0xf]
      %v212 = vld [vmem:[%s198 + $0x34] sm:$0xf]
      %v213 = vld [vmem:[%s198 + $0x38] sm:$0xf]
      %v214 = vld [vmem:[%s198 + $0x3c] sm:$0xf]
      %v226 = vunpack.c.l.b16 %v171
      %v227 = vunpack.c.l.b16 %v172
      %v228 = vunpack.c.l.b16 %v173
      %v229 = vunpack.c.l.b16 %v174
      %v230 = vunpack.c.l.b16 %v175
      %v231 = vunpack.c.l.b16 %v176
      %v232 = vunpack.c.l.b16 %v177
      %v233 = vunpack.c.l.b16 %v178
      %v234 = vunpack.c.l.b16 %v179
      %v235 = vunpack.c.l.b16 %v180
      %v236 = vunpack.c.l.b16 %v197
      %v237 = vpack.c.b16 %v227, %v226
      %v238 = vpack.c.b16 %v229, %v228
      %v239 = vpack.c.b16 %v231, %v230
      %v240 = vpack.c.b16 %v233, %v232
      %v241 = vpack.c.b16 %v235, %v234
      %v242 = vpack.c.b16 %v236, %v236
      %vm243 = vsmask.f32 7424
      %v245 = vshrl.u32 %v237, 16
      %v247 = vshll.u32 %v237, 16
      %v249 = vrot.slane %v247, 1
      %v250 = vor.u32 %v245, %v249
      %v252 = vshll.u32 %v238, 16
      %v254 = vrot.slane %v252, 1
      %v255 = vsel %vm243, %v250, %v254
      %v256 = vshrl.u32 %v238, 16
      %v258 = vor.u32 %v256, %v254
      %v260 = vshll.u32 %v239, 16
      %v262 = vrot.slane %v260, 1
      %v263 = vsel %vm243, %v258, %v262
      %v264 = vshrl.u32 %v239, 16
      %v266 = vor.u32 %v264, %v262
      %v268 = vshll.u32 %v240, 16
      %v270 = vrot.slane %v268, 1
      %v271 = vsel %vm243, %v266, %v270
      %v272 = vshrl.u32 %v240, 16
      %v274 = vor.u32 %v272, %v270
      %v276 = vshll.u32 %v241, 16
      %v278 = vrot.slane %v276, 1
      %v279 = vsel %vm243, %v274, %v278
      %v280 = vshrl.u32 %v241, 16
      %v282 = vor.u32 %v280, %v278
      %v284 = vshll.u32 %v242, 16
      %v286 = vrot.slane %v284, 1
      %v287 = vsel %vm243, %v282, %v286
      %v309 = vunpack.c.l.b16 %v199
      %v310 = vunpack.c.l.b16 %v200
      %v311 = vunpack.c.l.b16 %v201
      %v312 = vunpack.c.l.b16 %v202
      %v313 = vunpack.c.l.b16 %v203
      %v314 = vunpack.c.l.b16 %v204
      %v315 = vunpack.c.l.b16 %v205
      %v316 = vunpack.c.l.b16 %v206
      %v317 = vunpack.c.l.b16 %v207
      %v318 = vunpack.c.l.b16 %v208
      %v319 = vunpack.c.l.b16 %v209
      %v320 = vunpack.c.l.b16 %v210
      %v321 = vunpack.c.l.b16 %v211
      %v322 = vunpack.c.l.b16 %v212
      %v323 = vunpack.c.l.b16 %v213
      %v324 = vunpack.c.l.b16 %v214
      %v325 = vpack.c.b16 %v310, %v309
      %v326 = vpack.c.b16 %v312, %v311
      %v327 = vpack.c.b16 %v314, %v313
      %v328 = vpack.c.b16 %v316, %v315
      %v329 = vpack.c.b16 %v318, %v317
      %v330 = vpack.c.b16 %v320, %v319
      %v331 = vpack.c.b16 %v322, %v321
      %v332 = vpack.c.b16 %v324, %v323
      %341 = vmatpush.bf16.msra.mxu0 %v332
      %342 = vmatpush.bf16.msra.mxu0 %v331
      %343 = vmatpush.bf16.msra.mxu0 %v330
      %344 = vmatpush.bf16.msra.mxu0 %v329
      %345 = vmatpush.bf16.msra.mxu0 %v328
      %346 = vmatpush.bf16.msra.mxu0 %v327
      %347 = vmatpush.bf16.msra.mxu0 %v326
      %348 = vmatpush.bf16.msra.mxu0 %v325
      %349 = vmatmul.bf16.gmra.mxu0 %v255
      %v350 = vpop.f32.mrf.mxu0
      %v351 = vadd.f32 0.0, %v350
      %v352 = vpop.f32.mrf.mxu0
      %v353 = vadd.f32 0.0, %v352
      %354 = vmatmul.bf16.gmra.mxu0 %v263
      %v355 = vpop.f32.mrf.mxu0
      %v356 = vadd.f32 0.0, %v355
      %v357 = vpop.f32.mrf.mxu0
      %v358 = vadd.f32 0.0, %v357
      %359 = vmatmul.bf16.gmra.mxu0 %v271
      %v360 = vpop.f32.mrf.mxu0
      %v361 = vadd.f32 0.0, %v360
      %v362 = vpop.f32.mrf.mxu0
      %v363 = vadd.f32 0.0, %v362
      %364 = vmatmul.bf16.gmra.mxu0 %v279
      %v365 = vpop.f32.mrf.mxu0
      %v366 = vadd.f32 0.0, %v365
      %v367 = vpop.f32.mrf.mxu0
      %v368 = vadd.f32 0.0, %v367
      %369 = vmatmul.bf16.gmra.mxu0 %v287
      %v370 = vpop.f32.mrf.mxu0
      %v371 = vadd.f32 0.0, %v370
      %v372 = vpop.f32.mrf.mxu0
      %v373 = vadd.f32 0.0, %v372
      %374 = vdwg.mxu0
      %v396 = vunpack.c.l.b16 %v181
      %v397 = vunpack.c.l.b16 %v182
      %v398 = vunpack.c.l.b16 %v183
      %v399 = vunpack.c.l.b16 %v184
      %v400 = vunpack.c.l.b16 %v185
      %v401 = vunpack.c.l.b16 %v186
      %v402 = vunpack.c.l.b16 %v187
      %v403 = vunpack.c.l.b16 %v188
      %v404 = vunpack.c.l.b16 %v189
      %v405 = vunpack.c.l.b16 %v190
      %v406 = vunpack.c.l.b16 %v191
      %v407 = vunpack.c.l.b16 %v192
      %v408 = vunpack.c.l.b16 %v193
      %v409 = vunpack.c.l.b16 %v194
      %v410 = vunpack.c.l.b16 %v195
      %v411 = vunpack.c.l.b16 %v196
      %v412 = vpack.c.b16 %v397, %v396
      %v413 = vpack.c.b16 %v399, %v398
      %v414 = vpack.c.b16 %v401, %v400
      %v415 = vpack.c.b16 %v403, %v402
      %v416 = vpack.c.b16 %v405, %v404
      %v417 = vpack.c.b16 %v407, %v406
      %v418 = vpack.c.b16 %v409, %v408
      %v419 = vpack.c.b16 %v411, %v410
      %428 = vmatpush.bf16.msra.mxu0 %v419
      %429 = vmatpush.bf16.msra.mxu0 %v418
      %430 = vmatpush.bf16.msra.mxu0 %v417
      %431 = vmatpush.bf16.msra.mxu0 %v416
      %432 = vmatpush.bf16.msra.mxu0 %v415
      %433 = vmatpush.bf16.msra.mxu0 %v414
      %434 = vmatpush.bf16.msra.mxu0 %v413
      %435 = vmatpush.bf16.msra.mxu0 %v412
      %436 = vmatmul.bf16.gmra.mxu0 %v237
      %v437 = vpop.f32.mrf.mxu0
      %v438 = vadd.f32 %v351, %v437
      %v439 = vpop.f32.mrf.mxu0
      %v440 = vadd.f32 %v353, %v439
      %441 = vmatmul.bf16.gmra.mxu0 %v238
      %v442 = vpop.f32.mrf.mxu0
      %v443 = vadd.f32 %v356, %v442
      %v444 = vpop.f32.mrf.mxu0
      %v445 = vadd.f32 %v358, %v444
      %446 = vmatmul.bf16.gmra.mxu0 %v239
      %v447 = vpop.f32.mrf.mxu0
      %v448 = vadd.f32 %v361, %v447
      %v449 = vpop.f32.mrf.mxu0
      %v450 = vadd.f32 %v363, %v449
      %451 = vmatmul.bf16.gmra.mxu0 %v240
      %v452 = vpop.f32.mrf.mxu0
      %v453 = vadd.f32 %v366, %v452
      %v454 = vpop.f32.mrf.mxu0
      %v455 = vadd.f32 %v368, %v454
      %456 = vmatmul.bf16.gmra.mxu0 %v241
      %v457 = vpop.f32.mrf.mxu0
      %v458 = vadd.f32 %v371, %v457
      %v459 = vpop.f32.mrf.mxu0
      %v460 = vadd.f32 %v373, %v459
      %461 = vdwg.mxu0
      %v462 = vld [vmem:[%s165] sm:$0xe]
      %s463 = scalar_lea.vmem %s1, 128
      %v464 = vld [vmem:[%s463] sm:$0xf]
      %v465 = vld [vmem:[%s463 + $0x4] sm:$0xf]
      %v466 = vld [vmem:[%s463 + $0x8] sm:$0xf]
      %v467 = vld [vmem:[%s463 + $0xc] sm:$0xf]
      %v468 = vld [vmem:[%s463 + $0x10] sm:$0xf]
      %v469 = vld [vmem:[%s463 + $0x14] sm:$0xf]
      %v470 = vld [vmem:[%s463 + $0x18] sm:$0xf]
      %v471 = vld [vmem:[%s463 + $0x1c] sm:$0xf]
      %v472 = vld [vmem:[%s463 + $0x20] sm:$0xf]
      %v473 = vld [vmem:[%s463 + $0x24] sm:$0xf]
      %v474 = vld [vmem:[%s463 + $0x28] sm:$0xf]
      %v475 = vld [vmem:[%s463 + $0x2c] sm:$0xf]
      %v476 = vld [vmem:[%s463 + $0x30] sm:$0xf]
      %v477 = vld [vmem:[%s463 + $0x34] sm:$0xf]
      %v478 = vld [vmem:[%s463 + $0x38] sm:$0xf]
      %v479 = vld [vmem:[%s463 + $0x3c] sm:$0xf]
      %v481 = vunpack.c.l.b16 %v462
      %v482 = vpack.c.b16 %v227, %v481
      %vm483 = vcmask 1046528
      %v484 = vrot.slane %v482, 1
      %v485 = vrot.slane %v238, 1
      %v486 = vsel %vm483, %v484, %v485
      %v487 = vrot.slane %v239, 1
      %v488 = vsel %vm483, %v485, %v487
      %v489 = vrot.slane %v240, 1
      %v490 = vsel %vm483, %v487, %v489
      %v491 = vrot.slane %v241, 1
      %v492 = vsel %vm483, %v489, %v491
      %v493 = vrot.slane %v242, 1
      %v494 = vsel %vm483, %v491, %v493
      %v516 = vunpack.c.l.b16 %v464
      %v517 = vunpack.c.l.b16 %v465
      %v518 = vunpack.c.l.b16 %v466
      %v519 = vunpack.c.l.b16 %v467
      %v520 = vunpack.c.l.b16 %v468
      %v521 = vunpack.c.l.b16 %v469
      %v522 = vunpack.c.l.b16 %v470
      %v523 = vunpack.c.l.b16 %v471
      %v524 = vunpack.c.l.b16 %v472
      %v525 = vunpack.c.l.b16 %v473
      %v526 = vunpack.c.l.b16 %v474
      %v527 = vunpack.c.l.b16 %v475
      %v528 = vunpack.c.l.b16 %v476
      %v529 = vunpack.c.l.b16 %v477
      %v530 = vunpack.c.l.b16 %v478
      %v531 = vunpack.c.l.b16 %v479
      %v532 = vpack.c.b16 %v517, %v516
      %v533 = vpack.c.b16 %v519, %v518
      %v534 = vpack.c.b16 %v521, %v520
      %v535 = vpack.c.b16 %v523, %v522
      %v536 = vpack.c.b16 %v525, %v524
      %v537 = vpack.c.b16 %v527, %v526
      %v538 = vpack.c.b16 %v529, %v528
      %v539 = vpack.c.b16 %v531, %v530
      %548 = vmatpush.bf16.msra.mxu0 %v539
      %549 = vmatpush.bf16.msra.mxu0 %v538
      %550 = vmatpush.bf16.msra.mxu0 %v537
      %551 = vmatpush.bf16.msra.mxu0 %v536
      %552 = vmatpush.bf16.msra.mxu0 %v535
      %553 = vmatpush.bf16.msra.mxu0 %v534
      %554 = vmatpush.bf16.msra.mxu0 %v533
      %555 = vmatpush.bf16.msra.mxu0 %v532
      %556 = vmatmul.bf16.gmra.mxu0 %v486
      %v557 = vpop.f32.mrf.mxu0
      %v558 = vadd.f32 0.0, %v557
      %v559 = vpop.f32.mrf.mxu0
      %v560 = vadd.f32 0.0, %v559
      %561 = vmatmul.bf16.gmra.mxu0 %v488
      %v562 = vpop.f32.mrf.mxu0
      %v563 = vadd.f32 0.0, %v562
      %v564 = vpop.f32.mrf.mxu0
      %v565 = vadd.f32 0.0, %v564
      %566 = vmatmul.bf16.gmra.mxu0 %v490
      %v567 = vpop.f32.mrf.mxu0
      %v568 = vadd.f32 0.0, %v567
      %v569 = vpop.f32.mrf.mxu0
      %v570 = vadd.f32 0.0, %v569
      %571 = vmatmul.bf16.gmra.mxu0 %v492
      %v572 = vpop.f32.mrf.mxu0
      %v573 = vadd.f32 0.0, %v572
      %v574 = vpop.f32.mrf.mxu0
      %v575 = vadd.f32 0.0, %v574
      %576 = vmatmul.bf16.gmra.mxu0 %v494
      %v577 = vpop.f32.mrf.mxu0
      %v578 = vadd.f32 0.0, %v577
      %v579 = vpop.f32.mrf.mxu0
      %v580 = vadd.f32 0.0, %v579
      %581 = vdwg.mxu0
      %v582 = vadd.f32 %v438, %v558
      %v583 = vadd.f32 %v440, %v560
      %v584 = vadd.f32 %v443, %v563
      %v585 = vadd.f32 %v445, %v565
      %v586 = vadd.f32 %v448, %v568
      %v587 = vadd.f32 %v450, %v570
      %v588 = vadd.f32 %v453, %v573
      %v589 = vadd.f32 %v455, %v575
      %v590 = vadd.f32 %v458, %v578
      %v591 = vadd.f32 %v460, %v580
      %v592 = vld [vmem:[%s165 + $0x4] sm:$0xe]
      %v593 = vld [vmem:[%s165 + $0x8] sm:$0xf]
      %v594 = vld [vmem:[%s165 + $0xc] sm:$0xf]
      %v595 = vld [vmem:[%s165 + $0x10] sm:$0xf]
      %v596 = vld [vmem:[%s165 + $0x14] sm:$0xf]
      %v597 = vld [vmem:[%s165 + $0x18] sm:$0xf]
      %v598 = vld [vmem:[%s165 + $0x1c] sm:$0xf]
      %v599 = vld [vmem:[%s165 + $0x20] sm:$0xf]
      %v600 = vld [vmem:[%s165 + $0x24] sm:$0xf]
      %v601 = vld [vmem:[%s165 + $0x28] sm:$0xf]
      %v602 = vld [vmem:[%s165 + $0x2c] sm:$0x1]
      %s603 = scalar_lea.vmem %s1, 192
      %v604 = vld [vmem:[%s603] sm:$0xf]
      %v605 = vld [vmem:[%s603 + $0x4] sm:$0xf]
      %v606 = vld [vmem:[%s603 + $0x8] sm:$0xf]
      %v607 = vld [vmem:[%s603 + $0xc] sm:$0xf]
      %v608 = vld [vmem:[%s603 + $0x10] sm:$0xf]
      %v609 = vld [vmem:[%s603 + $0x14] sm:$0xf]
      %v610 = vld [vmem:[%s603 + $0x18] sm:$0xf]
      %v611 = vld [vmem:[%s603 + $0x1c] sm:$0xf]
      %v612 = vld [vmem:[%s603 + $0x20] sm:$0xf]
      %v613 = vld [vmem:[%s603 + $0x24] sm:$0xf]
      %v614 = vld [vmem:[%s603 + $0x28] sm:$0xf]
      %v615 = vld [vmem:[%s603 + $0x2c] sm:$0xf]
      %v616 = vld [vmem:[%s603 + $0x30] sm:$0xf]
      %v617 = vld [vmem:[%s603 + $0x34] sm:$0xf]
      %v618 = vld [vmem:[%s603 + $0x38] sm:$0xf]
      %v619 = vld [vmem:[%s603 + $0x3c] sm:$0xf]
      %v631 = vunpack.c.l.b16 %v592
      %v632 = vunpack.c.l.b16 %v593
      %v633 = vunpack.c.l.b16 %v594
      %v634 = vunpack.c.l.b16 %v595
      %v635 = vunpack.c.l.b16 %v596
      %v636 = vunpack.c.l.b16 %v597
      %v637 = vunpack.c.l.b16 %v598
      %v638 = vunpack.c.l.b16 %v599
      %v639 = vunpack.c.l.b16 %v600
      %v640 = vunpack.c.l.b16 %v601
      %v641 = vunpack.c.l.b16 %v602
      %v642 = vpack.c.b16 %v632, %v631
      %v643 = vpack.c.b16 %v634, %v633
      %v644 = vpack.c.b16 %v636, %v635
      %v645 = vpack.c.b16 %v638, %v637
      %v646 = vpack.c.b16 %v640, %v639
      %v647 = vpack.c.b16 %v641, %v641
      %v648 = vrot.slane %v642, 1
      %v649 = vrot.slane %v643, 1
      %v650 = vsel %vm483, %v648, %v649
      %v651 = vrot.slane %v644, 1
      %v652 = vsel %vm483, %v649, %v651
      %v653 = vrot.slane %v645, 1
      %v654 = vsel %vm483, %v651, %v653
      %v655 = vrot.slane %v646, 1
      %v656 = vsel %vm483, %v653, %v655
      %v657 = vrot.slane %v647, 1
      %v658 = vsel %vm483, %v655, %v657
      %v680 = vunpack.c.l.b16 %v604
      %v681 = vunpack.c.l.b16 %v605
      %v682 = vunpack.c.l.b16 %v606
      %v683 = vunpack.c.l.b16 %v607
      %v684 = vunpack.c.l.b16 %v608
      %v685 = vunpack.c.l.b16 %v609
      %v686 = vunpack.c.l.b16 %v610
      %v687 = vunpack.c.l.b16 %v611
      %v688 = vunpack.c.l.b16 %v612
      %v689 = vunpack.c.l.b16 %v613
      %v690 = vunpack.c.l.b16 %v614
      %v691 = vunpack.c.l.b16 %v615
      %v692 = vunpack.c.l.b16 %v616
      %v693 = vunpack.c.l.b16 %v617
      %v694 = vunpack.c.l.b16 %v618
      %v695 = vunpack.c.l.b16 %v619
      %v696 = vpack.c.b16 %v681, %v680
      %v697 = vpack.c.b16 %v683, %v682
      %v698 = vpack.c.b16 %v685, %v684
      %v699 = vpack.c.b16 %v687, %v686
      %v700 = vpack.c.b16 %v689, %v688
      %v701 = vpack.c.b16 %v691, %v690
      %v702 = vpack.c.b16 %v693, %v692
      %v703 = vpack.c.b16 %v695, %v694
      %712 = vmatpush.bf16.msra.mxu0 %v703
      %713 = vmatpush.bf16.msra.mxu0 %v702
      %714 = vmatpush.bf16.msra.mxu0 %v701
      %715 = vmatpush.bf16.msra.mxu0 %v700
      %716 = vmatpush.bf16.msra.mxu0 %v699
      %717 = vmatpush.bf16.msra.mxu0 %v698
      %718 = vmatpush.bf16.msra.mxu0 %v697
      %719 = vmatpush.bf16.msra.mxu0 %v696
      %720 = vmatmul.bf16.gmra.mxu0 %v650
      %v721 = vpop.f32.mrf.mxu0
      %v722 = vadd.f32 0.0, %v721
      %v723 = vpop.f32.mrf.mxu0
      %v724 = vadd.f32 0.0, %v723
      %725 = vmatmul.bf16.gmra.mxu0 %v652
      %v726 = vpop.f32.mrf.mxu0
      %v727 = vadd.f32 0.0, %v726
      %v728 = vpop.f32.mrf.mxu0
      %v729 = vadd.f32 0.0, %v728
      %730 = vmatmul.bf16.gmra.mxu0 %v654
      %v731 = vpop.f32.mrf.mxu0
      %v732 = vadd.f32 0.0, %v731
      %v733 = vpop.f32.mrf.mxu0
      %v734 = vadd.f32 0.0, %v733
      %735 = vmatmul.bf16.gmra.mxu0 %v656
      %v736 = vpop.f32.mrf.mxu0
      %v737 = vadd.f32 0.0, %v736
      %v738 = vpop.f32.mrf.mxu0
      %v739 = vadd.f32 0.0, %v738
      %740 = vmatmul.bf16.gmra.mxu0 %v658
      %v741 = vpop.f32.mrf.mxu0
      %v742 = vadd.f32 0.0, %v741
      %v743 = vpop.f32.mrf.mxu0
      %v744 = vadd.f32 0.0, %v743
      %745 = vdwg.mxu0
      %v746 = vadd.f32 %v582, %v722
      %v747 = vadd.f32 %v583, %v724
      %v748 = vadd.f32 %v584, %v727
      %v749 = vadd.f32 %v585, %v729
      %v750 = vadd.f32 %v586, %v732
      %v751 = vadd.f32 %v587, %v734
      %v752 = vadd.f32 %v588, %v737
      %v753 = vadd.f32 %v589, %v739
      %v754 = vadd.f32 %v590, %v742
      %v755 = vadd.f32 %v591, %v744
      %v756 = vld [vmem:[%s165 + $0x2c] sm:$0x3]
      %s757 = scalar_lea.vmem %s1, 256
      %v758 = vld [vmem:[%s757] sm:$0xf]
      %v759 = vld [vmem:[%s757 + $0x4] sm:$0xf]
      %v760 = vld [vmem:[%s757 + $0x8] sm:$0xf]
      %v761 = vld [vmem:[%s757 + $0xc] sm:$0xf]
      %v762 = vld [vmem:[%s757 + $0x10] sm:$0xf]
      %v763 = vld [vmem:[%s757 + $0x14] sm:$0xf]
      %v764 = vld [vmem:[%s757 + $0x18] sm:$0xf]
      %v765 = vld [vmem:[%s757 + $0x1c] sm:$0xf]
      %v766 = vld [vmem:[%s757 + $0x20] sm:$0xf]
      %v767 = vld [vmem:[%s757 + $0x24] sm:$0xf]
      %v768 = vld [vmem:[%s757 + $0x28] sm:$0xf]
      %v769 = vld [vmem:[%s757 + $0x2c] sm:$0xf]
      %v770 = vld [vmem:[%s757 + $0x30] sm:$0xf]
      %v771 = vld [vmem:[%s757 + $0x34] sm:$0xf]
      %v772 = vld [vmem:[%s757 + $0x38] sm:$0xf]
      %v773 = vld [vmem:[%s757 + $0x3c] sm:$0xf]
      %v775 = vunpack.c.l.b16 %v756
      %v776 = vpack.c.b16 %v775, %v775
      %vm777 = vsmask.f32 6400
      %v779 = vshrl.u32 %v642, 16
      %v781 = vrot.slane %v779, 1
      %v782 = vshll.u32 %v642, 16
      %v784 = vrot.slane %v782, 2
      %v785 = vor.u32 %v781, %v784
      %v787 = vshrl.u32 %v643, 16
      %v789 = vrot.slane %v787, 1
      %v790 = vshll.u32 %v643, 16
      %v792 = vrot.slane %v790, 2
      %v793 = vor.u32 %v789, %v792
      %v794 = vsel %vm777, %v785, %v793
      %v796 = vshrl.u32 %v644, 16
      %v798 = vrot.slane %v796, 1
      %v799 = vshll.u32 %v644, 16
      %v801 = vrot.slane %v799, 2
      %v802 = vor.u32 %v798, %v801
      %v803 = vsel %vm777, %v793, %v802
      %v805 = vshrl.u32 %v645, 16
      %v807 = vrot.slane %v805, 1
      %v808 = vshll.u32 %v645, 16
      %v810 = vrot.slane %v808, 2
      %v811 = vor.u32 %v807, %v810
      %v812 = vsel %vm777, %v802, %v811
      %v814 = vshrl.u32 %v646, 16
      %v816 = vrot.slane %v814, 1
      %v817 = vshll.u32 %v646, 16
      %v819 = vrot.slane %v817, 2
      %v820 = vor.u32 %v816, %v819
      %v821 = vsel %vm777, %v811, %v820
      %v823 = vshrl.u32 %v776, 16
      %v825 = vrot.slane %v823, 1
      %v826 = vshll.u32 %v776, 16
      %v828 = vrot.slane %v826, 2
      %v829 = vor.u32 %v825, %v828
      %v830 = vsel %vm777, %v820, %v829
      %v852 = vunpack.c.l.b16 %v758
      %v853 = vunpack.c.l.b16 %v759
      %v854 = vunpack.c.l.b16 %v760
      %v855 = vunpack.c.l.b16 %v761
      %v856 = vunpack.c.l.b16 %v762
      %v857 = vunpack.c.l.b16 %v763
      %v858 = vunpack.c.l.b16 %v764
      %v859 = vunpack.c.l.b16 %v765
      %v860 = vunpack.c.l.b16 %v766
      %v861 = vunpack.c.l.b16 %v767
      %v862 = vunpack.c.l.b16 %v768
      %v863 = vunpack.c.l.b16 %v769
      %v864 = vunpack.c.l.b16 %v770
      %v865 = vunpack.c.l.b16 %v771
      %v866 = vunpack.c.l.b16 %v772
      %v867 = vunpack.c.l.b16 %v773
      %v868 = vpack.c.b16 %v853, %v852
      %v869 = vpack.c.b16 %v855, %v854
      %v870 = vpack.c.b16 %v857, %v856
      %v871 = vpack.c.b16 %v859, %v858
      %v872 = vpack.c.b16 %v861, %v860
      %v873 = vpack.c.b16 %v863, %v862
      %v874 = vpack.c.b16 %v865, %v864
      %v875 = vpack.c.b16 %v867, %v866
      %884 = vmatpush.bf16.msra.mxu0 %v875
      %885 = vmatpush.bf16.msra.mxu0 %v874
      %886 = vmatpush.bf16.msra.mxu0 %v873
      %887 = vmatpush.bf16.msra.mxu0 %v872
      %888 = vmatpush.bf16.msra.mxu0 %v871
      %889 = vmatpush.bf16.msra.mxu0 %v870
      %890 = vmatpush.bf16.msra.mxu0 %v869
      %891 = vmatpush.bf16.msra.mxu0 %v868
      %892 = vmatmul.bf16.gmra.mxu0 %v794
      %v893 = vpop.f32.mrf.mxu0
      %v894 = vadd.f32 0.0, %v893
      %v895 = vpop.f32.mrf.mxu0
      %v896 = vadd.f32 0.0, %v895
      %897 = vmatmul.bf16.gmra.mxu0 %v803
      %v898 = vpop.f32.mrf.mxu0
      %v899 = vadd.f32 0.0, %v898
      %v900 = vpop.f32.mrf.mxu0
      %v901 = vadd.f32 0.0, %v900
      %902 = vmatmul.bf16.gmra.mxu0 %v812
      %v903 = vpop.f32.mrf.mxu0
      %v904 = vadd.f32 0.0, %v903
      %v905 = vpop.f32.mrf.mxu0
      %v906 = vadd.f32 0.0, %v905
      %907 = vmatmul.bf16.gmra.mxu0 %v821
      %v908 = vpop.f32.mrf.mxu0
      %v909 = vadd.f32 0.0, %v908
      %v910 = vpop.f32.mrf.mxu0
      %v911 = vadd.f32 0.0, %v910
      %912 = vmatmul.bf16.gmra.mxu0 %v830
      %v913 = vpop.f32.mrf.mxu0
      %v914 = vadd.f32 0.0, %v913
      %v915 = vpop.f32.mrf.mxu0
      %v916 = vadd.f32 0.0, %v915
      %917 = vdwg.mxu0
      %v918 = vadd.f32 %v746, %v894
      %v919 = vadd.f32 %v747, %v896
      %v920 = vadd.f32 %v748, %v899
      %v921 = vadd.f32 %v749, %v901
      %v922 = vadd.f32 %v750, %v904
      %v923 = vadd.f32 %v751, %v906
      %v924 = vadd.f32 %v752, %v909
      %v925 = vadd.f32 %v753, %v911
      %v926 = vadd.f32 %v754, %v914
      %v927 = vadd.f32 %v755, %v916
      %v928 = vld [vmem:[%s165 + $0x4] sm:$0xc]
      %s929 = scalar_lea.vmem %s1, 320
      %v930 = vld [vmem:[%s929] sm:$0xf]
      %v931 = vld [vmem:[%s929 + $0x4] sm:$0xf]
      %v932 = vld [vmem:[%s929 + $0x8] sm:$0xf]
      %v933 = vld [vmem:[%s929 + $0xc] sm:$0xf]
      %v934 = vld [vmem:[%s929 + $0x10] sm:$0xf]
      %v935 = vld [vmem:[%s929 + $0x14] sm:$0xf]
      %v936 = vld [vmem:[%s929 + $0x18] sm:$0xf]
      %v937 = vld [vmem:[%s929 + $0x1c] sm:$0xf]
      %v938 = vld [vmem:[%s929 + $0x20] sm:$0xf]
      %v939 = vld [vmem:[%s929 + $0x24] sm:$0xf]
      %v940 = vld [vmem:[%s929 + $0x28] sm:$0xf]
      %v941 = vld [vmem:[%s929 + $0x2c] sm:$0xf]
      %v942 = vld [vmem:[%s929 + $0x30] sm:$0xf]
      %v943 = vld [vmem:[%s929 + $0x34] sm:$0xf]
      %v944 = vld [vmem:[%s929 + $0x38] sm:$0xf]
      %v945 = vld [vmem:[%s929 + $0x3c] sm:$0xf]
      %v947 = vunpack.c.l.b16 %v928
      %v948 = vpack.c.b16 %v632, %v947
      %vm949 = vcmask 1045504
      %v950 = vrot.slane %v948, 2
      %v951 = vrot.slane %v643, 2
      %v952 = vsel %vm949, %v950, %v951
      %v953 = vrot.slane %v644, 2
      %v954 = vsel %vm949, %v951, %v953
      %v955 = vrot.slane %v645, 2
      %v956 = vsel %vm949, %v953, %v955
      %v957 = vrot.slane %v646, 2
      %v958 = vsel %vm949, %v955, %v957
      %v959 = vrot.slane %v776, 2
      %v960 = vsel %vm949, %v957, %v959
      %v982 = vunpack.c.l.b16 %v930
      %v983 = vunpack.c.l.b16 %v931
      %v984 = vunpack.c.l.b16 %v932
      %v985 = vunpack.c.l.b16 %v933
      %v986 = vunpack.c.l.b16 %v934
      %v987 = vunpack.c.l.b16 %v935
      %v988 = vunpack.c.l.b16 %v936
      %v989 = vunpack.c.l.b16 %v937
      %v990 = vunpack.c.l.b16 %v938
      %v991 = vunpack.c.l.b16 %v939
      %v992 = vunpack.c.l.b16 %v940
      %v993 = vunpack.c.l.b16 %v941
      %v994 = vunpack.c.l.b16 %v942
      %v995 = vunpack.c.l.b16 %v943
      %v996 = vunpack.c.l.b16 %v944
      %v997 = vunpack.c.l.b16 %v945
      %v998 = vpack.c.b16 %v983, %v982
      %v999 = vpack.c.b16 %v985, %v984
      %v1000 = vpack.c.b16 %v987, %v986
      %v1001 = vpack.c.b16 %v989, %v988
      %v1002 = vpack.c.b16 %v991, %v990
      %v1003 = vpack.c.b16 %v993, %v992
      %v1004 = vpack.c.b16 %v995, %v994
      %v1005 = vpack.c.b16 %v997, %v996
      %1014 = vmatpush.bf16.msra.mxu0 %v1005
      %1015 = vmatpush.bf16.msra.mxu0 %v1004
      %1016 = vmatpush.bf16.msra.mxu0 %v1003
      %1017 = vmatpush.bf16.msra.mxu0 %v1002
      %1018 = vmatpush.bf16.msra.mxu0 %v1001
      %1019 = vmatpush.bf16.msra.mxu0 %v1000
      %1020 = vmatpush.bf16.msra.mxu0 %v999
      %1021 = vmatpush.bf16.msra.mxu0 %v998
      %1022 = vmatmul.bf16.gmra.mxu0 %v952
      %v1023 = vpop.f32.mrf.mxu0
      %v1024 = vadd.f32 0.0, %v1023
      %v1025 = vpop.f32.mrf.mxu0
      %v1026 = vadd.f32 0.0, %v1025
      %1027 = vmatmul.bf16.gmra.mxu0 %v954
      %v1028 = vpop.f32.mrf.mxu0
      %v1029 = vadd.f32 0.0, %v1028
      %v1030 = vpop.f32.mrf.mxu0
      %v1031 = vadd.f32 0.0, %v1030
      %1032 = vmatmul.bf16.gmra.mxu0 %v956
      %v1033 = vpop.f32.mrf.mxu0
      %v1034 = vadd.f32 0.0, %v1033
      %v1035 = vpop.f32.mrf.mxu0
      %v1036 = vadd.f32 0.0, %v1035
      %1037 = vmatmul.bf16.gmra.mxu0 %v958
      %v1038 = vpop.f32.mrf.mxu0
      %v1039 = vadd.f32 0.0, %v1038
      %v1040 = vpop.f32.mrf.mxu0
      %v1041 = vadd.f32 0.0, %v1040
      %1042 = vmatmul.bf16.gmra.mxu0 %v960
      %v1043 = vpop.f32.mrf.mxu0
      %v1044 = vadd.f32 0.0, %v1043
      %v1045 = vpop.f32.mrf.mxu0
      %v1046 = vadd.f32 0.0, %v1045
      %1047 = vdwg.mxu0
      %v1048 = vadd.f32 %v918, %v1024
      %v1049 = vadd.f32 %v919, %v1026
      %v1050 = vadd.f32 %v920, %v1029
      %v1051 = vadd.f32 %v921, %v1031
      %v1052 = vadd.f32 %v922, %v1034
      %v1053 = vadd.f32 %v923, %v1036
      %v1054 = vadd.f32 %v924, %v1039
      %v1055 = vadd.f32 %v925, %v1041
      %v1056 = vadd.f32 %v926, %v1044
      %v1057 = vadd.f32 %v927, %v1046
      %v1058 = vld [vmem:[%s165 + $0x8] sm:$0xc]
      %v1059 = vld [vmem:[%s165 + $0xc] sm:$0xf]
      %v1060 = vld [vmem:[%s165 + $0x10] sm:$0xf]
      %v1061 = vld [vmem:[%s165 + $0x14] sm:$0xf]
      %v1062 = vld [vmem:[%s165 + $0x18] sm:$0xf]
      %v1063 = vld [vmem:[%s165 + $0x1c] sm:$0xf]
      %v1064 = vld [vmem:[%s165 + $0x20] sm:$0xf]
      %v1065 = vld [vmem:[%s165 + $0x24] sm:$0xf]
      %v1066 = vld [vmem:[%s165 + $0x28] sm:$0xf]
      %v1067 = vld [vmem:[%s165 + $0x2c] sm:$0xf]
      %v1068 = vld [vmem:[%s165 + $0x30] sm:$0x3]
      %s1069 = scalar_lea.vmem %s1, 384
      %v1070 = vld [vmem:[%s1069] sm:$0xf]
      %v1071 = vld [vmem:[%s1069 + $0x4] sm:$0xf]
      %v1072 = vld [vmem:[%s1069 + $0x8] sm:$0xf]
      %v1073 = vld [vmem:[%s1069 + $0xc] sm:$0xf]
      %v1074 = vld [vmem:[%s1069 + $0x10] sm:$0xf]
      %v1075 = vld [vmem:[%s1069 + $0x14] sm:$0xf]
      %v1076 = vld [vmem:[%s1069 + $0x18] sm:$0xf]
      %v1077 = vld [vmem:[%s1069 + $0x1c] sm:$0xf]
      %v1078 = vld [vmem:[%s1069 + $0x20] sm:$0xf]
      %v1079 = vld [vmem:[%s1069 + $0x24] sm:$0xf]
      %v1080 = vld [vmem:[%s1069 + $0x28] sm:$0xf]
      %v1081 = vld [vmem:[%s1069 + $0x2c] sm:$0xf]
      %v1082 = vld [vmem:[%s1069 + $0x30] sm:$0xf]
      %v1083 = vld [vmem:[%s1069 + $0x34] sm:$0xf]
      %v1084 = vld [vmem:[%s1069 + $0x38] sm:$0xf]
      %v1085 = vld [vmem:[%s1069 + $0x3c] sm:$0xf]
      %v1097 = vunpack.c.l.b16 %v1058
      %v1098 = vunpack.c.l.b16 %v1059
      %v1099 = vunpack.c.l.b16 %v1060
      %v1100 = vunpack.c.l.b16 %v1061
      %v1101 = vunpack.c.l.b16 %v1062
      %v1102 = vunpack.c.l.b16 %v1063
      %v1103 = vunpack.c.l.b16 %v1064
      %v1104 = vunpack.c.l.b16 %v1065
      %v1105 = vunpack.c.l.b16 %v1066
      %v1106 = vunpack.c.l.b16 %v1067
      %v1107 = vunpack.c.l.b16 %v1068
      %v1108 = vpack.c.b16 %v1098, %v1097
      %v1109 = vpack.c.b16 %v1100, %v1099
      %v1110 = vpack.c.b16 %v1102, %v1101
      %v1111 = vpack.c.b16 %v1104, %v1103
      %v1112 = vpack.c.b16 %v1106, %v1105
      %v1113 = vpack.c.b16 %v1107, %v1107
      %v1114 = vrot.slane %v1108, 2
      %v1115 = vrot.slane %v1109, 2
      %v1116 = vsel %vm949, %v1114, %v1115
      %v1117 = vrot.slane %v1110, 2
      %v1118 = vsel %vm949, %v1115, %v1117
      %v1119 = vrot.slane %v1111, 2
      %v1120 = vsel %vm949, %v1117, %v1119
      %v1121 = vrot.slane %v1112, 2
      %v1122 = vsel %vm949, %v1119, %v1121
      %v1123 = vrot.slane %v1113, 2
      %v1124 = vsel %vm949, %v1121, %v1123
      %v1146 = vunpack.c.l.b16 %v1070
      %v1147 = vunpack.c.l.b16 %v1071
      %v1148 = vunpack.c.l.b16 %v1072
      %v1149 = vunpack.c.l.b16 %v1073
      %v1150 = vunpack.c.l.b16 %v1074
      %v1151 = vunpack.c.l.b16 %v1075
      %v1152 = vunpack.c.l.b16 %v1076
      %v1153 = vunpack.c.l.b16 %v1077
      %v1154 = vunpack.c.l.b16 %v1078
      %v1155 = vunpack.c.l.b16 %v1079
      %v1156 = vunpack.c.l.b16 %v1080
      %v1157 = vunpack.c.l.b16 %v1081
      %v1158 = vunpack.c.l.b16 %v1082
      %v1159 = vunpack.c.l.b16 %v1083
      %v1160 = vunpack.c.l.b16 %v1084
      %v1161 = vunpack.c.l.b16 %v1085
      %v1162 = vpack.c.b16 %v1147, %v1146
      %v1163 = vpack.c.b16 %v1149, %v1148
      %v1164 = vpack.c.b16 %v1151, %v1150
      %v1165 = vpack.c.b16 %v1153, %v1152
      %v1166 = vpack.c.b16 %v1155, %v1154
      %v1167 = vpack.c.b16 %v1157, %v1156
      %v1168 = vpack.c.b16 %v1159, %v1158
      %v1169 = vpack.c.b16 %v1161, %v1160
      %1178 = vmatpush.bf16.msra.mxu0 %v1169
      %1179 = vmatpush.bf16.msra.mxu0 %v1168
      %1180 = vmatpush.bf16.msra.mxu0 %v1167
      %1181 = vmatpush.bf16.msra.mxu0 %v1166
      %1182 = vmatpush.bf16.msra.mxu0 %v1165
      %1183 = vmatpush.bf16.msra.mxu0 %v1164
      %1184 = vmatpush.bf16.msra.mxu0 %v1163
      %1185 = vmatpush.bf16.msra.mxu0 %v1162
      %1186 = vmatmul.bf16.gmra.mxu0 %v1116
      %v1187 = vpop.f32.mrf.mxu0
      %v1188 = vadd.f32 0.0, %v1187
      %v1189 = vpop.f32.mrf.mxu0
      %v1190 = vadd.f32 0.0, %v1189
      %1191 = vmatmul.bf16.gmra.mxu0 %v1118
      %v1192 = vpop.f32.mrf.mxu0
      %v1193 = vadd.f32 0.0, %v1192
      %v1194 = vpop.f32.mrf.mxu0
      %v1195 = vadd.f32 0.0, %v1194
      %1196 = vmatmul.bf16.gmra.mxu0 %v1120
      %v1197 = vpop.f32.mrf.mxu0
      %v1198 = vadd.f32 0.0, %v1197
      %v1199 = vpop.f32.mrf.mxu0
      %v1200 = vadd.f32 0.0, %v1199
      %1201 = vmatmul.bf16.gmra.mxu0 %v1122
      %v1202 = vpop.f32.mrf.mxu0
      %v1203 = vadd.f32 0.0, %v1202
      %v1204 = vpop.f32.mrf.mxu0
      %v1205 = vadd.f32 0.0, %v1204
      %1206 = vmatmul.bf16.gmra.mxu0 %v1124
      %v1207 = vpop.f32.mrf.mxu0
      %v1208 = vadd.f32 0.0, %v1207
      %v1209 = vpop.f32.mrf.mxu0
      %v1210 = vadd.f32 0.0, %v1209
      %1211 = vdwg.mxu0
      %v1212 = vadd.f32 %v1048, %v1188
      %v1213 = vadd.f32 %v1049, %v1190
      %v1214 = vadd.f32 %v1050, %v1193
      %v1215 = vadd.f32 %v1051, %v1195
      %v1216 = vadd.f32 %v1052, %v1198
      %v1217 = vadd.f32 %v1053, %v1200
      %v1218 = vadd.f32 %v1054, %v1203
      %v1219 = vadd.f32 %v1055, %v1205
      %v1220 = vadd.f32 %v1056, %v1208
      %v1221 = vadd.f32 %v1057, %v1210
      %v1222 = vld [vmem:[%s165 + $0x30] sm:$0x7]
      %s1223 = scalar_lea.vmem %s1, 448
      %v1224 = vld [vmem:[%s1223] sm:$0xf]
      %v1225 = vld [vmem:[%s1223 + $0x4] sm:$0xf]
      %v1226 = vld [vmem:[%s1223 + $0x8] sm:$0xf]
      %v1227 = vld [vmem:[%s1223 + $0xc] sm:$0xf]
      %v1228 = vld [vmem:[%s1223 + $0x10] sm:$0xf]
      %v1229 = vld [vmem:[%s1223 + $0x14] sm:$0xf]
      %v1230 = vld [vmem:[%s1223 + $0x18] sm:$0xf]
      %v1231 = vld [vmem:[%s1223 + $0x1c] sm:$0xf]
      %v1232 = vld [vmem:[%s1223 + $0x20] sm:$0xf]
      %v1233 = vld [vmem:[%s1223 + $0x24] sm:$0xf]
      %v1234 = vld [vmem:[%s1223 + $0x28] sm:$0xf]
      %v1235 = vld [vmem:[%s1223 + $0x2c] sm:$0xf]
      %v1236 = vld [vmem:[%s1223 + $0x30] sm:$0xf]
      %v1237 = vld [vmem:[%s1223 + $0x34] sm:$0xf]
      %v1238 = vld [vmem:[%s1223 + $0x38] sm:$0xf]
      %v1239 = vld [vmem:[%s1223 + $0x3c] sm:$0xf]
      %v1241 = vunpack.c.l.b16 %v1222
      %v1242 = vpack.c.b16 %v1241, %v1241
      %vm1243 = vsmask.f32 5376
      %v1245 = vshrl.u32 %v1108, 16
      %v1247 = vrot.slane %v1245, 2
      %v1248 = vshll.u32 %v1108, 16
      %v1250 = vrot.slane %v1248, 3
      %v1251 = vor.u32 %v1247, %v1250
      %v1253 = vshrl.u32 %v1109, 16
      %v1255 = vrot.slane %v1253, 2
      %v1256 = vshll.u32 %v1109, 16
      %v1258 = vrot.slane %v1256, 3
      %v1259 = vor.u32 %v1255, %v1258
      %v1260 = vsel %vm1243, %v1251, %v1259
      %v1262 = vshrl.u32 %v1110, 16
      %v1264 = vrot.slane %v1262, 2
      %v1265 = vshll.u32 %v1110, 16
      %v1267 = vrot.slane %v1265, 3
      %v1268 = vor.u32 %v1264, %v1267
      %v1269 = vsel %vm1243, %v1259, %v1268
      %v1271 = vshrl.u32 %v1111, 16
      %v1273 = vrot.slane %v1271, 2
      %v1274 = vshll.u32 %v1111, 16
      %v1276 = vrot.slane %v1274, 3
      %v1277 = vor.u32 %v1273, %v1276
      %v1278 = vsel %vm1243, %v1268, %v1277
      %v1280 = vshrl.u32 %v1112, 16
      %v1282 = vrot.slane %v1280, 2
      %v1283 = vshll.u32 %v1112, 16
      %v1285 = vrot.slane %v1283, 3
      %v1286 = vor.u32 %v1282, %v1285
      %v1287 = vsel %vm1243, %v1277, %v1286
      %v1289 = vshrl.u32 %v1242, 16
      %v1291 = vrot.slane %v1289, 2
      %v1292 = vshll.u32 %v1242, 16
      %v1294 = vrot.slane %v1292, 3
      %v1295 = vor.u32 %v1291, %v1294
      %v1296 = vsel %vm1243, %v1286, %v1295
      %v1318 = vunpack.c.l.b16 %v1224
      %v1319 = vunpack.c.l.b16 %v1225
      %v1320 = vunpack.c.l.b16 %v1226
      %v1321 = vunpack.c.l.b16 %v1227
      %v1322 = vunpack.c.l.b16 %v1228
      %v1323 = vunpack.c.l.b16 %v1229
      %v1324 = vunpack.c.l.b16 %v1230
      %v1325 = vunpack.c.l.b16 %v1231
      %v1326 = vunpack.c.l.b16 %v1232
      %v1327 = vunpack.c.l.b16 %v1233
      %v1328 = vunpack.c.l.b16 %v1234
      %v1329 = vunpack.c.l.b16 %v1235
      %v1330 = vunpack.c.l.b16 %v1236
      %v1331 = vunpack.c.l.b16 %v1237
      %v1332 = vunpack.c.l.b16 %v1238
      %v1333 = vunpack.c.l.b16 %v1239
      %v1334 = vpack.c.b16 %v1319, %v1318
      %v1335 = vpack.c.b16 %v1321, %v1320
      %v1336 = vpack.c.b16 %v1323, %v1322
      %v1337 = vpack.c.b16 %v1325, %v1324
      %v1338 = vpack.c.b16 %v1327, %v1326
      %v1339 = vpack.c.b16 %v1329, %v1328
      %v1340 = vpack.c.b16 %v1331, %v1330
      %v1341 = vpack.c.b16 %v1333, %v1332
      %1350 = vmatpush.bf16.msra.mxu0 %v1341
      %1351 = vmatpush.bf16.msra.mxu0 %v1340
      %1352 = vmatpush.bf16.msra.mxu0 %v1339
      %1353 = vmatpush.bf16.msra.mxu0 %v1338
      %1354 = vmatpush.bf16.msra.mxu0 %v1337
      %1355 = vmatpush.bf16.msra.mxu0 %v1336
      %1356 = vmatpush.bf16.msra.mxu0 %v1335
      %1357 = vmatpush.bf16.msra.mxu0 %v1334
      %1358 = vmatmul.bf16.gmra.mxu0 %v1260
      %v1359 = vpop.f32.mrf.mxu0
      %v1360 = vadd.f32 0.0, %v1359
      %v1361 = vpop.f32.mrf.mxu0
      %v1362 = vadd.f32 0.0, %v1361
      %1363 = vmatmul.bf16.gmra.mxu0 %v1269
      %v1364 = vpop.f32.mrf.mxu0
      %v1365 = vadd.f32 0.0, %v1364
      %v1366 = vpop.f32.mrf.mxu0
      %v1367 = vadd.f32 0.0, %v1366
      %1368 = vmatmul.bf16.gmra.mxu0 %v1278
      %v1369 = vpop.f32.mrf.mxu0
      %v1370 = vadd.f32 0.0, %v1369
      %v1371 = vpop.f32.mrf.mxu0
      %v1372 = vadd.f32 0.0, %v1371
      %1373 = vmatmul.bf16.gmra.mxu0 %v1287
      %v1374 = vpop.f32.mrf.mxu0
      %v1375 = vadd.f32 0.0, %v1374
      %v1376 = vpop.f32.mrf.mxu0
      %v1377 = vadd.f32 0.0, %v1376
      %1378 = vmatmul.bf16.gmra.mxu0 %v1296
      %v1379 = vpop.f32.mrf.mxu0
      %v1380 = vadd.f32 0.0, %v1379
      %v1381 = vpop.f32.mrf.mxu0
      %v1382 = vadd.f32 0.0, %v1381
      %1383 = vdwg.mxu0
      %v1384 = vadd.f32 %v1212, %v1360
      %v1385 = vadd.f32 %v1213, %v1362
      %v1386 = vadd.f32 %v1214, %v1365
      %v1387 = vadd.f32 %v1215, %v1367
      %v1388 = vadd.f32 %v1216, %v1370
      %v1389 = vadd.f32 %v1217, %v1372
      %v1390 = vadd.f32 %v1218, %v1375
      %v1391 = vadd.f32 %v1219, %v1377
      %v1392 = vadd.f32 %v1220, %v1380
      %v1393 = vadd.f32 %v1221, %v1382
      %v1394 = vld [vmem:[%s165 + $0x8] sm:$0x8]
      %s1395 = scalar_lea.vmem %s1, 512
      %v1396 = vld [vmem:[%s1395] sm:$0xf]
      %v1397 = vld [vmem:[%s1395 + $0x4] sm:$0xf]
      %v1398 = vld [vmem:[%s1395 + $0x8] sm:$0xf]
      %v1399 = vld [vmem:[%s1395 + $0xc] sm:$0xf]
      %v1400 = vld [vmem:[%s1395 + $0x10] sm:$0xf]
      %v1401 = vld [vmem:[%s1395 + $0x14] sm:$0xf]
      %v1402 = vld [vmem:[%s1395 + $0x18] sm:$0xf]
      %v1403 = vld [vmem:[%s1395 + $0x1c] sm:$0xf]
      %v1404 = vld [vmem:[%s1395 + $0x20] sm:$0xf]
      %v1405 = vld [vmem:[%s1395 + $0x24] sm:$0xf]
      %v1406 = vld [vmem:[%s1395 + $0x28] sm:$0xf]
      %v1407 = vld [vmem:[%s1395 + $0x2c] sm:$0xf]
      %v1408 = vld [vmem:[%s1395 + $0x30] sm:$0xf]
      %v1409 = vld [vmem:[%s1395 + $0x34] sm:$0xf]
      %v1410 = vld [vmem:[%s1395 + $0x38] sm:$0xf]
      %v1411 = vld [vmem:[%s1395 + $0x3c] sm:$0xf]
      %v1413 = vunpack.c.l.b16 %v1394
      %v1414 = vpack.c.b16 %v1098, %v1413
      %vm1415 = vcmask 1044480
      %v1416 = vrot.slane %v1414, 3
      %v1417 = vrot.slane %v1109, 3
      %v1418 = vsel %vm1415, %v1416, %v1417
      %v1419 = vrot.slane %v1110, 3
      %v1420 = vsel %vm1415, %v1417, %v1419
      %v1421 = vrot.slane %v1111, 3
      %v1422 = vsel %vm1415, %v1419, %v1421
      %v1423 = vrot.slane %v1112, 3
      %v1424 = vsel %vm1415, %v1421, %v1423
      %v1425 = vrot.slane %v1242, 3
      %v1426 = vsel %vm1415, %v1423, %v1425
      %v1448 = vunpack.c.l.b16 %v1396
      %v1449 = vunpack.c.l.b16 %v1397
      %v1450 = vunpack.c.l.b16 %v1398
      %v1451 = vunpack.c.l.b16 %v1399
      %v1452 = vunpack.c.l.b16 %v1400
      %v1453 = vunpack.c.l.b16 %v1401
      %v1454 = vunpack.c.l.b16 %v1402
      %v1455 = vunpack.c.l.b16 %v1403
      %v1456 = vunpack.c.l.b16 %v1404
      %v1457 = vunpack.c.l.b16 %v1405
      %v1458 = vunpack.c.l.b16 %v1406
      %v1459 = vunpack.c.l.b16 %v1407
      %v1460 = vunpack.c.l.b16 %v1408
      %v1461 = vunpack.c.l.b16 %v1409
      %v1462 = vunpack.c.l.b16 %v1410
      %v1463 = vunpack.c.l.b16 %v1411
      %v1464 = vpack.c.b16 %v1449, %v1448
      %v1465 = vpack.c.b16 %v1451, %v1450
      %v1466 = vpack.c.b16 %v1453, %v1452
      %v1467 = vpack.c.b16 %v1455, %v1454
      %v1468 = vpack.c.b16 %v1457, %v1456
      %v1469 = vpack.c.b16 %v1459, %v1458
      %v1470 = vpack.c.b16 %v1461, %v1460
      %v1471 = vpack.c.b16 %v1463, %v1462
      %1480 = vmatpush.bf16.msra.mxu0 %v1471
      %1481 = vmatpush.bf16.msra.mxu0 %v1470
      %1482 = vmatpush.bf16.msra.mxu0 %v1469
      %1483 = vmatpush.bf16.msra.mxu0 %v1468
      %1484 = vmatpush.bf16.msra.mxu0 %v1467
      %1485 = vmatpush.bf16.msra.mxu0 %v1466
      %1486 = vmatpush.bf16.msra.mxu0 %v1465
      %1487 = vmatpush.bf16.msra.mxu0 %v1464
      %1488 = vmatmul.bf16.gmra.mxu0 %v1418
      %v1489 = vpop.f32.mrf.mxu0
      %v1490 = vadd.f32 0.0, %v1489
      %v1491 = vpop.f32.mrf.mxu0
      %v1492 = vadd.f32 0.0, %v1491
      %1493 = vmatmul.bf16.gmra.mxu0 %v1420
      %v1494 = vpop.f32.mrf.mxu0
      %v1495 = vadd.f32 0.0, %v1494
      %v1496 = vpop.f32.mrf.mxu0
      %v1497 = vadd.f32 0.0, %v1496
      %1498 = vmatmul.bf16.gmra.mxu0 %v1422
      %v1499 = vpop.f32.mrf.mxu0
      %v1500 = vadd.f32 0.0, %v1499
      %v1501 = vpop.f32.mrf.mxu0
      %v1502 = vadd.f32 0.0, %v1501
      %1503 = vmatmul.bf16.gmra.mxu0 %v1424
      %v1504 = vpop.f32.mrf.mxu0
      %v1505 = vadd.f32 0.0, %v1504
      %v1506 = vpop.f32.mrf.mxu0
      %v1507 = vadd.f32 0.0, %v1506
      %1508 = vmatmul.bf16.gmra.mxu0 %v1426
      %v1509 = vpop.f32.mrf.mxu0
      %v1510 = vadd.f32 0.0, %v1509
      %v1511 = vpop.f32.mrf.mxu0
      %v1512 = vadd.f32 0.0, %v1511
      %1513 = vdwg.mxu0
      %v1514 = vadd.f32 %v1384, %v1490
      %v1515 = vadd.f32 %v1385, %v1492
      %v1516 = vadd.f32 %v1386, %v1495
      %v1517 = vadd.f32 %v1387, %v1497
      %v1518 = vadd.f32 %v1388, %v1500
      %v1519 = vadd.f32 %v1389, %v1502
      %v1520 = vadd.f32 %v1390, %v1505
      %v1521 = vadd.f32 %v1391, %v1507
      %v1522 = vadd.f32 %v1392, %v1510
      %v1523 = vadd.f32 %v1393, %v1512
      %v1524 = vld [vmem:[%s2] sm:$0x1]
      %v1526 = vperm.slane %v1524, 0
      %v1528 = vadd.f32 %v1514, %v1526
      %v1529 = vadd.f32 %v1515, %v1526
      %v1530 = vadd.f32 %v1516, %v1526
      %v1531 = vadd.f32 %v1517, %v1526
      %v1532 = vadd.f32 %v1518, %v1526
      %v1533 = vadd.f32 %v1519, %v1526
      %v1534 = vadd.f32 %v1520, %v1526
      %v1535 = vadd.f32 %v1521, %v1526
      %v1536 = vadd.f32 %v1522, %v1526
      %v1537 = vadd.f32 %v1523, %v1526
      %vm1538 = vcmask 523264
      %1539 = vst.msk [vmem:[%s170] sm:$0xff] %vm1538, %v1528
      %1540 = vst.msk [vmem:[%s170 + $0x8] sm:$0xff] %vm1538, %v1529
      %1541 = vst.msk [vmem:[%s170 + $0x10] sm:$0xff] %vm1538, %v1530
      %1542 = vst.msk [vmem:[%s170 + $0x18] sm:$0xff] %vm1538, %v1531
      %1543 = vst.msk [vmem:[%s170 + $0x20] sm:$0xff] %vm1538, %v1532
      %1544 = vst.msk [vmem:[%s170 + $0x28] sm:$0xff] %vm1538, %v1533
      %1545 = vst.msk [vmem:[%s170 + $0x30] sm:$0xff] %vm1538, %v1534
      %1546 = vst.msk [vmem:[%s170 + $0x38] sm:$0xff] %vm1538, %v1535
      %1547 = vst.msk [vmem:[%s170 + $0x40] sm:$0xff] %vm1538, %v1536
      %1548 = vst.msk [vmem:[%s170 + $0x48] sm:$0xff] %vm1538, %v1537
      %p1549 = scmp.lt.s32.totalorder %s14, 1
      %s1550 = scalar_select %p1549, %s14, 1
      %s1551 = smul.addr %s1550, 10
      %s1552 = smul.addr %s1551, 8
      %s1553 = scalar_lea.vmem %s3, %s1552
      // Predicated region
      $region33: #{cnn_encoder_forward.1} parent=31 // pred_check
        %p1554 = pneg %p100
      $region34: #{cnn_encoder_forward.1} parent=31 // pred_check_branch
        %1556 = sbr.rel (%p1554) target = $region36
      $region35: #{cnn_encoder_forward.1} parent=31 // pred_region
        _
      $region36: #{cnn_encoder_forward.1} parent=31 // pred_fallthru
        _
    $region32: #{cnn_encoder_forward.1} parent=5 // pred_fallthru
      _
    %p1557 = scmp.le.s32.totalorder 2, %s9
    // Predicated region
    $region37: #{cnn_encoder_forward.1} parent=5 // pred_check
      %p1558 = pneg %p1557
    $region38: #{cnn_encoder_forward.1} parent=5 // pred_check_branch
      %1560 = sbr.rel (%p1558) target = $region40
    $region39: #{cnn_encoder_forward.1} parent=5 // pred_region
      %s1561 = ssub.s32 %s9, 2
      // Predicated region
      $region41: #{cnn_encoder_forward.1} parent=39 // pred_check
        %p1562 = pneg %p106
      $region42: #{cnn_encoder_forward.1} parent=39 // pred_check_branch
        %1564 = sbr.rel (%p1562) target = $region44
      $region43: #{cnn_encoder_forward.1} parent=39 // pred_region
        %p1565 = scmp.lt.s32.totalorder %s15, 1
        %s1566 = scalar_select %p1565, %s15, 1
        %s1567 = smul.addr %s1566, 10
        %s1568 = smul.addr %s1567, 8
        %s1569 = scalar_lea.vmem %s3, %s1568
      $region44: #{cnn_encoder_forward.1} parent=39 // pred_fallthru
        _
    $region40: #{cnn_encoder_forward.1} parent=5 // pred_fallthru
      _
  $region6: #{cnn_encoder_forward.1} parent=0 // loop_footer
    %s13 = sadd.s32 1, %s9
  $region7: #{cnn_encoder_forward.1} parent=0 // loop_footer_branch
    %8 = sbr.rel target = $region3
  $region8: #{cnn_encoder_forward.1} parent=0 // loop_exit
    _

</llo_original>
